<compile_context>
chip_gen: v6e
topology: v6e:2x2x1
jax: 0.10.0
libtpu: 0.0.40
codegen_flags: <defaults>
</compile_context>

<pallas_src>
import math

import jax
import jax.numpy as jnp
from jax.experimental import pallas as pl
from jax.experimental.pallas import tpu as pltpu


def conv_block_kernel(x_ref, w1_ref, b1_ref, w2_ref, b2_ref, o_ref,
                      xpad_ref, midpad_ref):
    """Fused Conv3x3+ReLU -> Conv3x3+ReLU for a tile of NB images.

    x_ref:      (NB, H, W*Cin)        input slab, channels packed on lanes
    w1_ref:     (3, W*Cin, W*C1)      per-vertical-tap Toeplitz stage-1 weights
    b1_ref:     (1, W*C1)             stage-1 bias tiled along width (f32)
    w2_ref:     (3, W*C1, W*C2)       per-vertical-tap Toeplitz stage-2 weights
    b2_ref:     (1, W*C2)             stage-2 bias tiled along width (f32)
    o_ref:      (NB, H, W*C2)         lane-dense output slab
    xpad_ref:   VMEM (NB, H+2, W*Cin) vertically zero-padded input (scratch)
    midpad_ref: VMEM (NB, H+2, W*C1)  vertically zero-padded stage-1 activation
    """
    NB, H, _ = x_ref.shape

    def conv3_relu(pad_ref, w_ref, b_ref):
        # 3 accumulating MXU dots (one per vertical tap), f32 accumulation.
        k = pad_ref.shape[-1]
        acc = None
        for ky in range(3):
            a = pad_ref[:, ky:ky + H, :].reshape(NB * H, k)
            d = jnp.dot(a, w_ref[ky], preferred_element_type=jnp.float32)
            acc = d if acc is None else acc + d
        return jnp.maximum(acc + b_ref[...].astype(jnp.float32), 0.0)

    # Zero only the boundary (padding) rows; interior rows are fully
    # overwritten below, so no full-slab fill is needed.
    z_x = jnp.zeros((NB, 1, xpad_ref.shape[-1]), xpad_ref.dtype)
    z_m = jnp.zeros((NB, 1, midpad_ref.shape[-1]), midpad_ref.dtype)
    xpad_ref[:, 0:1, :] = z_x
    xpad_ref[:, H + 1:H + 2, :] = z_x
    midpad_ref[:, 0:1, :] = z_m
    midpad_ref[:, H + 1:H + 2, :] = z_m

    # ---- stage 1 ---------------------------------------------------------
    xpad_ref[:, 1:H + 1, :] = x_ref[...]
    h1 = conv3_relu(xpad_ref, w1_ref, b1_ref)               # (NB*H, W*C1) f32

    # ---- stage 2: intermediate stays in VMEM (never touches HBM) ---------
    midpad_ref[:, 1:H + 1, :] = h1.reshape(NB, H, -1).astype(midpad_ref.dtype)
    h2 = conv3_relu(midpad_ref, w2_ref, b2_ref)             # (NB*H, W*C2) f32

    o_ref[...] = h2.reshape(NB, H, -1).astype(o_ref.dtype)


def _lane_padded_channels(c, w, lane=128):
    """Smallest C' >= c with (W*C') % 128 == 0, if the blow-up is modest."""
    step = lane // math.gcd(w, lane)
    padded = -(-c // step) * step
    return padded if (padded <= 2 * c or padded <= 8) else c


def _pad_last(a, axis, new):
    if new == a.shape[axis]:
        return a
    pads = [(0, 0)] * a.ndim
    pads[axis] = (0, new - a.shape[axis])
    return jnp.pad(a, pads)


def _toeplitz_weight(w, W):
    """Expand (3,3,Cin,Cout) conv weights into per-vertical-tap banded
    matrices of shape (3, W*Cin, W*Cout) so the width-direction conv (pad=1)
    becomes a plain matmul.  Row index = (wi, ci), col index = (wo, co);
    entry = w[ky, wi-wo+1, ci, co] when 0 <= wi-wo+1 < 3 else 0 (implicit
    horizontal zero padding)."""
    kh, kw, Cin, Cout = w.shape
    wi = jnp.arange(W)[:, None]
    wo = jnp.arange(W)[None, :]
    kx = wi - wo + (kw // 2)
    valid = (kx >= 0) & (kx < kw)
    w_g = w[:, jnp.clip(kx, 0, kw - 1), :, :]            # (kh, W, W, Cin, Cout)
    w_g = jnp.where(valid[None, :, :, None, None], w_g, 0.0)
    w_g = jnp.transpose(w_g, (0, 1, 3, 2, 4))            # (ky, wi, ci, wo, co)
    return w_g.reshape(kh, W * Cin, W * Cout)


def conv_2d_forward(x_nchw, params, compute_dtype=jnp.bfloat16):
    """Conv_2d.forward: two fused (conv3x3 pad=1 + ReLU) stages, NCHW in/out."""
    (w1, b1), (w2, b2) = params
    N, Cin, H, W = x_nchw.shape
    C1, C2 = w1.shape[-1], w2.shape[-1]
    out_dtype = x_nchw.dtype
    itemsize = jnp.dtype(compute_dtype).itemsize
    out_itemsize = jnp.dtype(out_dtype).itemsize

    # Lane-density padding: make W*Cin (and W*C1) multiples of 128 lanes.
    Cin_p = _lane_padded_channels(Cin, W)
    C1_p = _lane_padded_channels(C1, W)

    # Fold a batch tile into the matmul M dimension (target ~256 rows/step).
    sub = 16 if itemsize == 2 else 8          # sublane tile rows for the dtype
    NB = 1
    if H % sub == 0:
        target = max(1, 256 // H)
        for cand in range(1, N + 1):
            if N % cand == 0 and cand <= target:
                NB = cand

    # Wrapper-side layout plumbing (XLA): NCHW -> (N, H, W*Cin_p), bf16 slabs.
    x = jnp.transpose(x_nchw, (0, 2, 3, 1))                      # NHWC
    x = _pad_last(x, 3, Cin_p).reshape(N, H, W * Cin_p).astype(compute_dtype)

    w1_p = _pad_last(_pad_last(w1, 2, Cin_p), 3, C1_p)           # (3,3,Cin_p,C1_p)
    w2_p = _pad_last(w2, 2, C1_p)                                # (3,3,C1_p,C2)
    W1 = _toeplitz_weight(w1_p, W).astype(compute_dtype)         # (3, W*Cin_p, W*C1_p)
    W2 = _toeplitz_weight(w2_p, W).astype(compute_dtype)         # (3, W*C1_p,  W*C2)
    bias1 = jnp.tile(_pad_last(b1, 0, C1_p), W).reshape(1, W * C1_p).astype(jnp.float32)
    bias2 = jnp.tile(b2, W).reshape(1, W * C2).astype(jnp.float32)

    # VMEM footprint -> explicit scoped-VMEM limit (review item).
    blk_in = NB * H * W * Cin_p * itemsize
    blk_out = NB * H * W * C2 * out_itemsize
    wbytes = (W1.size + W2.size) * itemsize + (bias1.size + bias2.size) * 4
    scratch = NB * (H + 2) * (W * Cin_p + W * C1_p) * itemsize
    f32tmp = NB * H * (W * C1_p + W * C2) * 4 * 2
    footprint = 2 * (blk_in + blk_out + wbytes) + scratch + f32tmp
    vmem_limit = int(min(64 * 1024 * 1024, max(32 * 1024 * 1024, 2 * footprint)))

    flops = 2 * N * H * 3 * (W * Cin_p * W * C1_p + W * C1_p * W * C2)
    bytes_accessed = (x.size * itemsize + (W1.size + W2.size) * itemsize
                      + (bias1.size + bias2.size) * 4
                      + N * H * W * C2 * out_itemsize)

    out = pl.pallas_call(
        conv_block_kernel,
        out_shape=jax.ShapeDtypeStruct((N, H, W * C2), out_dtype),
        grid=(N // NB,),
        in_specs=[
            pl.BlockSpec((NB, H, W * Cin_p), lambda n: (n, 0, 0)),
            pl.BlockSpec((3, W * Cin_p, W * C1_p), lambda n: (0, 0, 0)),
            pl.BlockSpec((1, W * C1_p), lambda n: (0, 0)),
            pl.BlockSpec((3, W * C1_p, W * C2), lambda n: (0, 0, 0)),
            pl.BlockSpec((1, W * C2), lambda n: (0, 0)),
        ],
        out_specs=pl.BlockSpec((NB, H, W * C2), lambda n: (n, 0, 0)),
        scratch_shapes=[
            pltpu.VMEM((NB, H + 2, W * Cin_p), compute_dtype),
            pltpu.VMEM((NB, H + 2, W * C1_p), compute_dtype),
        ],
        compiler_params=pltpu.CompilerParams(
            dimension_semantics=("parallel",),
            vmem_limit_bytes=vmem_limit),
        cost_estimate=pl.CostEstimate(
            flops=int(flops), transcendentals=0,
            bytes_accessed=int(bytes_accessed)),
    )(x, W1, bias1, W2, bias2)

    # (N, H, W*C2) -> NCHW (metadata reshape/transpose in XLA).
    return jnp.transpose(out.reshape(N, H, W, C2), (0, 3, 1, 2))


def init_conv_params(key, in_channels, out_channels):
    """Deterministic init; PyTorch layout (Cout,Cin,3,3) -> (3,3,Cin,Cout)."""
    kw, kb = jax.random.split(key)
    fan_in = in_channels * 3 * 3
    bound = 1.0 / jnp.sqrt(fan_in)
    w_torch = jax.random.uniform(kw, (out_channels, in_channels, 3, 3),
                                 jnp.float32, -bound, bound)
    b = jax.random.uniform(kb, (out_channels,), jnp.float32, -bound, bound)
    w = jnp.transpose(w_torch, (2, 3, 1, 0))  # (3,3,Cin,Cout)
    return w, b


def _reference_forward(x_nchw, params):
    """Pure-JAX reference (lax conv, f32) for the correctness check."""
    y = x_nchw
    for (w, b) in params:
        w_oihw = jnp.transpose(w, (3, 2, 0, 1))
        y = jax.lax.conv_general_dilated(
            y, w_oihw, window_strides=(1, 1), padding=((1, 1), (1, 1)),
            dimension_numbers=("NCHW", "OIHW", "NCHW"))
        y = jnp.maximum(y + b.reshape(1, -1, 1, 1), 0.0)
    return y


if __name__ == "__main__":
    key = jax.random.PRNGKey(0)
    k_x, k_c1, k_c2 = jax.random.split(key, 3)

    N, Cin, Cout, H, W = 2, 4, 8, 16, 16
    x = jax.random.normal(k_x, (N, Cin, H, W), jnp.float32)

    params = (init_conv_params(k_c1, Cin, Cout),
              init_conv_params(k_c2, Cout, Cout))

    out = jax.block_until_ready(conv_2d_forward(x, params))
    ref = _reference_forward(x, params)

    assert out.shape == (N, Cout, H, W)
    # bf16 operands / f32 accumulation -> loosened tolerance vs f32 reference.
    max_err = float(jnp.max(jnp.abs(out - ref)))
    assert jnp.allclose(out, ref, atol=5e-2, rtol=5e-2), \
        f"mismatch vs reference (max abs err {max_err})"

    print("KERNEL_OK")
</pallas_src>

<mosaic_0001>
module attributes {stable_mosaic.version = 11 : i64} {
  func.func @conv_block_kernel(%arg0: i32, %arg1: memref<2x16x128xbf16, #tpu.memory_space<vmem>>, %arg2: memref<3x128x128xbf16, #tpu.memory_space<vmem>>, %arg3: memref<1x128xf32, #tpu.memory_space<vmem>>, %arg4: memref<3x128x128xbf16, #tpu.memory_space<vmem>>, %arg5: memref<1x128xf32, #tpu.memory_space<vmem>>, %arg6: memref<2x16x128xf32, #tpu.memory_space<vmem>>, %arg7: memref<2x18x128xbf16, #tpu.memory_space<vmem>>, %arg8: memref<2x18x128xbf16, #tpu.memory_space<vmem>>) attributes {dimension_semantics = [#tpu.dimension_semantics<parallel>], iteration_bounds = array<i64: 1>, scalar_prefetch = 0 : i64, scratch_operands = 2 : i64, tpu.core_type = #tpu.core_type<tc>, window_params = [{transform_indices = @transform_0, window_bounds = array<i64: 2, 16, 128>}, {pipeline_mode = #tpu.pipeline_mode<synchronous>, transform_indices = @transform_1, window_bounds = array<i64: 3, 128, 128>}, {pipeline_mode = #tpu.pipeline_mode<synchronous>, transform_indices = @transform_2, window_bounds = array<i64: 1, 128>}, {pipeline_mode = #tpu.pipeline_mode<synchronous>, transform_indices = @transform_3, window_bounds = array<i64: 3, 128, 128>}, {pipeline_mode = #tpu.pipeline_mode<synchronous>, transform_indices = @transform_4, window_bounds = array<i64: 1, 128>}, {transform_indices = @transform_5, window_bounds = array<i64: 2, 16, 128>}]} {
    %cst = arith.constant 0.000000e+00 : bf16
    %0 = vector.broadcast %cst : bf16 to vector<2x1x128xbf16>
    %cst_0 = arith.constant 0.000000e+00 : bf16
    %1 = vector.broadcast %cst_0 : bf16 to vector<2x1x128xbf16>
    %c0 = arith.constant 0 : index
    %c0_1 = arith.constant 0 : index
    %c0_2 = arith.constant 0 : index
    %2 = vector.load %arg7[%c0, %c0_1, %c0_2] : memref<2x18x128xbf16, #tpu.memory_space<vmem>>, vector<2x1x128xbf16>
    tpu.vector_store %arg7[%c0, %c0_1, %c0_2], %0 {strides = array<i32>} : memref<2x18x128xbf16, #tpu.memory_space<vmem>>, vector<2x1x128xbf16>,
    %c0_3 = arith.constant 0 : index
    %c17 = arith.constant 17 : index
    %c0_4 = arith.constant 0 : index
    %3 = vector.load %arg7[%c0_3, %c17, %c0_4] : memref<2x18x128xbf16, #tpu.memory_space<vmem>>, vector<2x1x128xbf16>
    tpu.vector_store %arg7[%c0_3, %c17, %c0_4], %0 {strides = array<i32>} : memref<2x18x128xbf16, #tpu.memory_space<vmem>>, vector<2x1x128xbf16>,
    %c0_5 = arith.constant 0 : index
    %c0_6 = arith.constant 0 : index
    %c0_7 = arith.constant 0 : index
    %4 = vector.load %arg8[%c0_5, %c0_6, %c0_7] : memref<2x18x128xbf16, #tpu.memory_space<vmem>>, vector<2x1x128xbf16>
    tpu.vector_store %arg8[%c0_5, %c0_6, %c0_7], %1 {strides = array<i32>} : memref<2x18x128xbf16, #tpu.memory_space<vmem>>, vector<2x1x128xbf16>,
    %c0_8 = arith.constant 0 : index
    %c17_9 = arith.constant 17 : index
    %c0_10 = arith.constant 0 : index
    %5 = vector.load %arg8[%c0_8, %c17_9, %c0_10] : memref<2x18x128xbf16, #tpu.memory_space<vmem>>, vector<2x1x128xbf16>
    tpu.vector_store %arg8[%c0_8, %c17_9, %c0_10], %1 {strides = array<i32>} : memref<2x18x128xbf16, #tpu.memory_space<vmem>>, vector<2x1x128xbf16>,
    %c0_11 = arith.constant 0 : index
    %c0_12 = arith.constant 0 : index
    %c0_13 = arith.constant 0 : index
    %6 = vector.load %arg1[%c0_11, %c0_12, %c0_13] : memref<2x16x128xbf16, #tpu.memory_space<vmem>>, vector<2x16x128xbf16>
    %c0_14 = arith.constant 0 : index
    %c1 = arith.constant 1 : index
    %c0_15 = arith.constant 0 : index
    %7 = vector.load %arg7[%c0_14, %c1, %c0_15] : memref<2x18x128xbf16, #tpu.memory_space<vmem>>, vector<2x16x128xbf16>
    tpu.vector_store %arg7[%c0_14, %c1, %c0_15], %6 {strides = array<i32>} : memref<2x18x128xbf16, #tpu.memory_space<vmem>>, vector<2x16x128xbf16>,
    %c0_16 = arith.constant 0 : index
    %c0_17 = arith.constant 0 : index
    %c0_18 = arith.constant 0 : index
    %8 = vector.load %arg7[%c0_16, %c0_17, %c0_18] : memref<2x18x128xbf16, #tpu.memory_space<vmem>>, vector<2x16x128xbf16>
    %9 = vector.shape_cast %8 : vector<2x16x128xbf16> to vector<32x128xbf16>
    %c0_19 = arith.constant 0 : index
    %c0_20 = arith.constant 0 : index
    %c0_21 = arith.constant 0 : index
    %10 = vector.load %arg2[%c0_19, %c0_20, %c0_21] : memref<3x128x128xbf16, #tpu.memory_space<vmem>>, vector<1x128x128xbf16>
    %11 = vector.shape_cast %10 : vector<1x128x128xbf16> to vector<128x128xbf16>
    %cst_22 = arith.constant dense<0.000000e+00> : vector<32x128xf32>
    %12 = tpu.matmul %9, %11, %cst_22 {dimension_numbers = #tpu.dot_dimension_numbers<[1], [0], [0], [1], [0, 0, 1, 1], [], []>} : vector<32x128xbf16>, vector<128x128xbf16>, vector<32x128xf32> -> vector<32x128xf32>
    %c0_23 = arith.constant 0 : index
    %c1_24 = arith.constant 1 : index
    %c0_25 = arith.constant 0 : index
    %13 = vector.load %arg7[%c0_23, %c1_24, %c0_25] : memref<2x18x128xbf16, #tpu.memory_space<vmem>>, vector<2x16x128xbf16>
    %14 = vector.shape_cast %13 : vector<2x16x128xbf16> to vector<32x128xbf16>
    %c1_26 = arith.constant 1 : index
    %c0_27 = arith.constant 0 : index
    %c0_28 = arith.constant 0 : index
    %15 = vector.load %arg2[%c1_26, %c0_27, %c0_28] : memref<3x128x128xbf16, #tpu.memory_space<vmem>>, vector<1x128x128xbf16>
    %16 = vector.shape_cast %15 : vector<1x128x128xbf16> to vector<128x128xbf16>
    %cst_29 = arith.constant dense<0.000000e+00> : vector<32x128xf32>
    %17 = tpu.matmul %14, %16, %cst_29 {dimension_numbers = #tpu.dot_dimension_numbers<[1], [0], [0], [1], [0, 0, 1, 1], [], []>} : vector<32x128xbf16>, vector<128x128xbf16>, vector<32x128xf32> -> vector<32x128xf32>
    %18 = arith.addf %12, %17 : vector<32x128xf32>
    %c0_30 = arith.constant 0 : index
    %c2 = arith.constant 2 : index
    %c0_31 = arith.constant 0 : index
    %19 = vector.load %arg7[%c0_30, %c2, %c0_31] : memref<2x18x128xbf16, #tpu.memory_space<vmem>>, vector<2x16x128xbf16>
    %20 = vector.shape_cast %19 : vector<2x16x128xbf16> to vector<32x128xbf16>
    %c2_32 = arith.constant 2 : index
    %c0_33 = arith.constant 0 : index
    %c0_34 = arith.constant 0 : index
    %21 = vector.load %arg2[%c2_32, %c0_33, %c0_34] : memref<3x128x128xbf16, #tpu.memory_space<vmem>>, vector<1x128x128xbf16>
    %22 = vector.shape_cast %21 : vector<1x128x128xbf16> to vector<128x128xbf16>
    %cst_35 = arith.constant dense<0.000000e+00> : vector<32x128xf32>
    %23 = tpu.matmul %20, %22, %cst_35 {dimension_numbers = #tpu.dot_dimension_numbers<[1], [0], [0], [1], [0, 0, 1, 1], [], []>} : vector<32x128xbf16>, vector<128x128xbf16>, vector<32x128xf32> -> vector<32x128xf32>
    %24 = arith.addf %18, %23 : vector<32x128xf32>
    %c0_36 = arith.constant 0 : index
    %c0_37 = arith.constant 0 : index
    %25 = vector.load %arg3[%c0_36, %c0_37] : memref<1x128xf32, #tpu.memory_space<vmem>>, vector<1x128xf32>
    %26 = vector.broadcast %25 : vector<1x128xf32> to vector<32x128xf32>
    %27 = arith.addf %24, %26 : vector<32x128xf32>
    %cst_38 = arith.constant 0.000000e+00 : f32
    %28 = vector.broadcast %cst_38 : f32 to vector<32x128xf32>
    %29 = arith.maximumf %27, %28 : vector<32x128xf32>
    %30 = vector.shape_cast %29 : vector<32x128xf32> to vector<2x16x128xf32>
    %31 = arith.truncf %30 : vector<2x16x128xf32> to vector<2x16x128xbf16>
    %c0_39 = arith.constant 0 : index
    %c1_40 = arith.constant 1 : index
    %c0_41 = arith.constant 0 : index
    %32 = vector.load %arg8[%c0_39, %c1_40, %c0_41] : memref<2x18x128xbf16, #tpu.memory_space<vmem>>, vector<2x16x128xbf16>
    tpu.vector_store %arg8[%c0_39, %c1_40, %c0_41], %31 {strides = array<i32>} : memref<2x18x128xbf16, #tpu.memory_space<vmem>>, vector<2x16x128xbf16>,
    %c0_42 = arith.constant 0 : index
    %c0_43 = arith.constant 0 : index
    %c0_44 = arith.constant 0 : index
    %33 = vector.load %arg8[%c0_42, %c0_43, %c0_44] : memref<2x18x128xbf16, #tpu.memory_space<vmem>>, vector<2x16x128xbf16>
    %34 = vector.shape_cast %33 : vector<2x16x128xbf16> to vector<32x128xbf16>
    %c0_45 = arith.constant 0 : index
    %c0_46 = arith.constant 0 : index
    %c0_47 = arith.constant 0 : index
    %35 = vector.load %arg4[%c0_45, %c0_46, %c0_47] : memref<3x128x128xbf16, #tpu.memory_space<vmem>>, vector<1x128x128xbf16>
    %36 = vector.shape_cast %35 : vector<1x128x128xbf16> to vector<128x128xbf16>
    %cst_48 = arith.constant dense<0.000000e+00> : vector<32x128xf32>
    %37 = tpu.matmul %34, %36, %cst_48 {dimension_numbers = #tpu.dot_dimension_numbers<[1], [0], [0], [1], [0, 0, 1, 1], [], []>} : vector<32x128xbf16>, vector<128x128xbf16>, vector<32x128xf32> -> vector<32x128xf32>
    %c0_49 = arith.constant 0 : index
    %c1_50 = arith.constant 1 : index
    %c0_51 = arith.constant 0 : index
    %38 = vector.load %arg8[%c0_49, %c1_50, %c0_51] : memref<2x18x128xbf16, #tpu.memory_space<vmem>>, vector<2x16x128xbf16>
    %39 = vector.shape_cast %38 : vector<2x16x128xbf16> to vector<32x128xbf16>
    %c1_52 = arith.constant 1 : index
    %c0_53 = arith.constant 0 : index
    %c0_54 = arith.constant 0 : index
    %40 = vector.load %arg4[%c1_52, %c0_53, %c0_54] : memref<3x128x128xbf16, #tpu.memory_space<vmem>>, vector<1x128x128xbf16>
    %41 = vector.shape_cast %40 : vector<1x128x128xbf16> to vector<128x128xbf16>
    %cst_55 = arith.constant dense<0.000000e+00> : vector<32x128xf32>
    %42 = tpu.matmul %39, %41, %cst_55 {dimension_numbers = #tpu.dot_dimension_numbers<[1], [0], [0], [1], [0, 0, 1, 1], [], []>} : vector<32x128xbf16>, vector<128x128xbf16>, vector<32x128xf32> -> vector<32x128xf32>
    %43 = arith.addf %37, %42 : vector<32x128xf32>
    %c0_56 = arith.constant 0 : index
    %c2_57 = arith.constant 2 : index
    %c0_58 = arith.constant 0 : index
    %44 = vector.load %arg8[%c0_56, %c2_57, %c0_58] : memref<2x18x128xbf16, #tpu.memory_space<vmem>>, vector<2x16x128xbf16>
    %45 = vector.shape_cast %44 : vector<2x16x128xbf16> to vector<32x128xbf16>
    %c2_59 = arith.constant 2 : index
    %c0_60 = arith.constant 0 : index
    %c0_61 = arith.constant 0 : index
    %46 = vector.load %arg4[%c2_59, %c0_60, %c0_61] : memref<3x128x128xbf16, #tpu.memory_space<vmem>>, vector<1x128x128xbf16>
    %47 = vector.shape_cast %46 : vector<1x128x128xbf16> to vector<128x128xbf16>
    %cst_62 = arith.constant dense<0.000000e+00> : vector<32x128xf32>
    %48 = tpu.matmul %45, %47, %cst_62 {dimension_numbers = #tpu.dot_dimension_numbers<[1], [0], [0], [1], [0, 0, 1, 1], [], []>} : vector<32x128xbf16>, vector<128x128xbf16>, vector<32x128xf32> -> vector<32x128xf32>
    %49 = arith.addf %43, %48 : vector<32x128xf32>
    %c0_63 = arith.constant 0 : index
    %c0_64 = arith.constant 0 : index
    %50 = vector.load %arg5[%c0_63, %c0_64] : memref<1x128xf32, #tpu.memory_space<vmem>>, vector<1x128xf32>
    %51 = vector.broadcast %50 : vector<1x128xf32> to vector<32x128xf32>
    %52 = arith.addf %49, %51 : vector<32x128xf32>
    %cst_65 = arith.constant 0.000000e+00 : f32
    %53 = vector.broadcast %cst_65 : f32 to vector<32x128xf32>
    %54 = arith.maximumf %52, %53 : vector<32x128xf32>
    %55 = vector.shape_cast %54 : vector<32x128xf32> to vector<2x16x128xf32>
    %c0_66 = arith.constant 0 : index
    %c0_67 = arith.constant 0 : index
    %c0_68 = arith.constant 0 : index
    %56 = vector.load %arg6[%c0_66, %c0_67, %c0_68] : memref<2x16x128xf32, #tpu.memory_space<vmem>>, vector<2x16x128xf32>
    tpu.vector_store %arg6[%c0_66, %c0_67, %c0_68], %55 {strides = array<i32>} : memref<2x16x128xf32, #tpu.memory_space<vmem>>, vector<2x16x128xf32>,
    return
  }
  func.func @transform_0(%arg0: i32) -> (i32, i32, i32) {
    %c0_i32 = arith.constant 0 : i32
    %c0_i32_0 = arith.constant 0 : i32
    %c0_i32_1 = arith.constant 0 : i32
    return %arg0, %c0_i32, %c0_i32_0 : i32, i32, i32
  }
  func.func @transform_1(%arg0: i32) -> (i32, i32, i32) {
    %c0_i32 = arith.constant 0 : i32
    %c0_i32_0 = arith.constant 0 : i32
    %c0_i32_1 = arith.constant 0 : i32
    %c0_i32_2 = arith.constant 0 : i32
    return %c0_i32, %c0_i32_0, %c0_i32_1 : i32, i32, i32
  }
  func.func @transform_2(%arg0: i32) -> (i32, i32) {
    %c0_i32 = arith.constant 0 : i32
    %c0_i32_0 = arith.constant 0 : i32
    %c0_i32_1 = arith.constant 0 : i32
    return %c0_i32, %c0_i32_0 : i32, i32
  }
  func.func @transform_3(%arg0: i32) -> (i32, i32, i32) {
    %c0_i32 = arith.constant 0 : i32
    %c0_i32_0 = arith.constant 0 : i32
    %c0_i32_1 = arith.constant 0 : i32
    %c0_i32_2 = arith.constant 0 : i32
    return %c0_i32, %c0_i32_0, %c0_i32_1 : i32, i32, i32
  }
  func.func @transform_4(%arg0: i32) -> (i32, i32) {
    %c0_i32 = arith.constant 0 : i32
    %c0_i32_0 = arith.constant 0 : i32
    %c0_i32_1 = arith.constant 0 : i32
    return %c0_i32, %c0_i32_0 : i32, i32
  }
  func.func @transform_5(%arg0: i32) -> (i32, i32, i32) {
    %c0_i32 = arith.constant 0 : i32
    %c0_i32_0 = arith.constant 0 : i32
    %c0_i32_1 = arith.constant 0 : i32
    return %arg0, %c0_i32, %c0_i32_0 : i32, i32, i32
  }
}

</mosaic_0001>

<llo_original>
// kernel: tpu_custom_call.1
$region0: #{tpu_custom_call.1}
  #allocation0 [shape = 'u32[]', space=smem, size = 0x4, offset = 0x4, fixed_abs, tag = 'smem constant byte address 0x4 - core index']
  #allocation1 [shape = 'u32[144,128]{1,0:T(1,128)}', space=vmem, size = 0x12000, scoped, tag = 'internal scratch']
  #allocation2 [shape = 'bf16[2,18,128]{2,1,0:T(8,128)(2,1)}', space=vmem, size = 0x3000, scoped, tag = 'scratch operand']
  #allocation3 [shape = 'bf16[2,18,128]{2,1,0:T(8,128)(2,1)}', space=vmem, size = 0x3000, scoped, tag = 'scratch operand']
  %s0 = inlined_call_operand.hbm [shape: bf16[2,16,128], index: 0, kind: input, shape index: {}]
  %s1 = inlined_call_operand.hbm [shape: bf16[3,128,128], index: 1, kind: input, shape index: {}]
  %s2 = inlined_call_operand.vmem [shape: f32[1,128], index: 2, kind: input, shape index: {}]
  %s3 = inlined_call_operand.hbm [shape: bf16[3,128,128], index: 3, kind: input, shape index: {}]
  %s4 = inlined_call_operand.vmem [shape: f32[1,128], index: 4, kind: input, shape index: {}]
  %s5 = inlined_call_operand.hbm [shape: f32[2,16,128], index: 5, kind: output, shape index: {}]
  %s6 = sld [smem:[#allocation0]]
  $region42: #{tpu_custom_call.1} parent=0
    _
  %s8 = ssub.s32 1, %s6
  %s9 = scalar_select 0, %s8, %s6
  $region1: #{tpu_custom_call.1} parent=0
    #allocation4 [shape = 'u8[8192]{0}', space=vmem, size = 0x2000, scoped, tag = 'input window, operand 0, single buffered']
    #allocation5 [shape = 's32[1]{0}', space=sflag, size = 0x4, scoped, tag = 'scoped memory for tpu_custom_call.1']
    #allocation6 [shape = 's32[1]{0}', space=sflag, size = 0x4, scoped, tag = 'scoped memory for tpu_custom_call.1']
    #allocation7 [shape = 'u8[98304]{0}', space=vmem, size = 0x18000, scoped, tag = 'input window, operand 1, single buffered']
    #allocation8 [shape = 's32[1]{0}', space=sflag, size = 0x4, scoped, tag = 'scoped memory for tpu_custom_call.1']
    #allocation9 [shape = 'u8[98304]{0}', space=vmem, size = 0x18000, scoped, tag = 'input window, operand 3, single buffered']
    #allocation10 [shape = 'u8[16384]{0}', space=vmem, size = 0x4000, scoped, tag = 'output window, operand 0, single buffered']
    %10 = vsyncpa [#allocation5], 0
    %11 = vsyncpa [#allocation8], 0
    %12 = vsyncpa [#allocation6], 0
    // Predicated region
    $region2: #{tpu_custom_call.1} parent=1 // pred_check
      _
    $region3: #{tpu_custom_call.1} parent=1 // pred_check_branch
      %14 = sbr.rel (0) target = $region5
    $region4: #{tpu_custom_call.1} parent=1 // pred_region
      %s16 = ssub.s32 256, 256
      %17 = vsyncadd [#allocation5], %s16
      %s18 = sshll.u32 [#allocation4], 4
      %s19 = int_to_ptr.vmem [resolvable:$true] %s18
      %24 = dma.hbm_to_vmem [thread:$0]  %s0, 256, %s19, [#allocation5], 64, 64, 4
    $region5: #{tpu_custom_call.1} parent=1 // pred_fallthru
      _
    // Predicated region
    $region6: #{tpu_custom_call.1} parent=1 // pred_check
      _
    $region7: #{tpu_custom_call.1} parent=1 // pred_check_branch
      %26 = sbr.rel (0) target = $region9
    $region8: #{tpu_custom_call.1} parent=1 // pred_region
      %s28 = ssub.s32 3072, 3072
      %29 = vsyncadd [#allocation8], %s28
      %s30 = sshll.u32 [#allocation7], 4
      %s31 = int_to_ptr.vmem [resolvable:$true] %s30
      %36 = dma.hbm_to_vmem [thread:$0]  %s1, 3072, %s31, [#allocation8], 64, 64, 4
    $region9: #{tpu_custom_call.1} parent=1 // pred_fallthru
      _
    // Predicated region
    $region10: #{tpu_custom_call.1} parent=1 // pred_check
      _
    $region11: #{tpu_custom_call.1} parent=1 // pred_check_branch
      %38 = sbr.rel (0) target = $region13
    $region12: #{tpu_custom_call.1} parent=1 // pred_region
      _
    $region13: #{tpu_custom_call.1} parent=1 // pred_fallthru
      _
    // Predicated region
    $region14: #{tpu_custom_call.1} parent=1 // pred_check
      _
    $region15: #{tpu_custom_call.1} parent=1 // pred_check_branch
      %40 = sbr.rel (0) target = $region17
    $region16: #{tpu_custom_call.1} parent=1 // pred_region
      %s42 = ssub.s32 3072, 3072
      %43 = vsyncadd [#allocation8], %s42
      %s44 = sshll.u32 [#allocation9], 4
      %s45 = int_to_ptr.vmem [resolvable:$true] %s44
      %50 = dma.hbm_to_vmem [thread:$0]  %s3, 3072, %s45, [#allocation8], 64, 64, 4
    $region17: #{tpu_custom_call.1} parent=1 // pred_fallthru
      _
    // Predicated region
    $region18: #{tpu_custom_call.1} parent=1 // pred_check
      _
    $region19: #{tpu_custom_call.1} parent=1 // pred_check_branch
      %52 = sbr.rel (0) target = $region21
    $region20: #{tpu_custom_call.1} parent=1 // pred_region
      _
    $region21: #{tpu_custom_call.1} parent=1 // pred_fallthru
      _
    // Predicated region
    $region22: #{tpu_custom_call.1} parent=1 // pred_check
      _
    $region23: #{tpu_custom_call.1} parent=1 // pred_check_branch
      %54 = sbr.rel (0) target = $region25
    $region24: #{tpu_custom_call.1} parent=1 // pred_region
      %55 = dma.done [#allocation5], 256
    $region25: #{tpu_custom_call.1} parent=1 // pred_fallthru
      _
    // Predicated region
    $region26: #{tpu_custom_call.1} parent=1 // pred_check
      _
    $region27: #{tpu_custom_call.1} parent=1 // pred_check_branch
      %57 = sbr.rel (0) target = $region29
    $region28: #{tpu_custom_call.1} parent=1 // pred_region
      %58 = dma.done [#allocation8], 3072
    $region29: #{tpu_custom_call.1} parent=1 // pred_fallthru
      _
    // Predicated region
    $region30: #{tpu_custom_call.1} parent=1 // pred_check
      _
    $region31: #{tpu_custom_call.1} parent=1 // pred_check_branch
      %60 = sbr.rel (0) target = $region33
    $region32: #{tpu_custom_call.1} parent=1 // pred_region
      %61 = dma.done [#allocation8], 3072
    $region33: #{tpu_custom_call.1} parent=1 // pred_fallthru
      _
    %vm63 = vcmask 1040384
    %vm64 = vsmask.f32 256
    %vm65 = vmand %vm63, %vm64
    %v66 = vld [vmem:[#allocation2] sm:$0x1]
    %v67 = vsel %vm65, 0, %v66
    %68 = vst [vmem:[#allocation2] sm:$0x1] %v67
    %v69 = vld [vmem:[#allocation2 + $0xc] sm:$0x1]
    %v70 = vsel %vm65, 0, %v69
    %71 = vst [vmem:[#allocation2 + $0xc] sm:$0x1] %v70
    %vm72 = vsmask.f32 7938
    %vm73 = vmand %vm63, %vm72
    %v74 = vld [vmem:[#allocation2 + $0x8] sm:$0x1]
    %v75 = vsel %vm73, 0, %v74
    %76 = vst [vmem:[#allocation2 + $0x8] sm:$0x1] %v75
    %v77 = vld [vmem:[#allocation2 + $0x14] sm:$0x1]
    %v78 = vsel %vm73, 0, %v77
    %79 = vst [vmem:[#allocation2 + $0x14] sm:$0x1] %v78
    %v80 = vld [vmem:[#allocation3] sm:$0x1]
    %v81 = vsel %vm65, 0, %v80
    %82 = vst [vmem:[#allocation3] sm:$0x1] %v81
    %v83 = vld [vmem:[#allocation3 + $0xc] sm:$0x1]
    %v84 = vsel %vm65, 0, %v83
    %85 = vst [vmem:[#allocation3 + $0xc] sm:$0x1] %v84
    %v86 = vld [vmem:[#allocation3 + $0x8] sm:$0x1]
    %v87 = vsel %vm73, 0, %v86
    %88 = vst [vmem:[#allocation3 + $0x8] sm:$0x1] %v87
    %v89 = vld [vmem:[#allocation3 + $0x14] sm:$0x1]
    %v90 = vsel %vm73, 0, %v89
    %91 = vst [vmem:[#allocation3 + $0x14] sm:$0x1] %v90
    %v92 = vld [vmem:[#allocation4] sm:$0xf]
    %v93 = vld [vmem:[#allocation4 + $0x4] sm:$0xf]
    %v94 = vld [vmem:[#allocation4 + $0x8] sm:$0xf]
    %v95 = vld [vmem:[#allocation4 + $0xc] sm:$0xf]
    %vm96 = vsmask.f32 4368
    %vm97 = vmor %vm64, %vm96
    %v99 = vshrl.u32 %v92, 16
    %v101 = vrot.slane %v99, 7
    %v102 = vshll.u32 %v92, 16
    %v104 = vor.u32 %v101, %v102
    %v105 = vrot.slane %v101, 4
    %v107 = vshrl.u32 %v93, 16
    %v109 = vrot.slane %v107, 7
    %v110 = vshll.u32 %v93, 16
    %v112 = vor.u32 %v109, %v110
    %v113 = vsel %vm97, %v105, %v112
    %v114 = vrot.slane %v109, 4
    %v116 = vshrl.u32 %v94, 16
    %v118 = vrot.slane %v116, 7
    %v119 = vshll.u32 %v94, 16
    %v121 = vor.u32 %v118, %v119
    %v122 = vrot.slane %v118, 4
    %v124 = vshrl.u32 %v95, 16
    %v126 = vrot.slane %v124, 7
    %v127 = vshll.u32 %v95, 16
    %v129 = vor.u32 %v126, %v127
    %v130 = vsel %vm97, %v122, %v129
    %v131 = vrot.slane %v126, 4
    %vm138 = vcmask 1043456
    %vm139 = vmand %vm138, %vm72
    %v140 = vld [vmem:[#allocation2] sm:$0xf]
    %v141 = vsel %vm139, %v104, %v140
    %142 = vst [vmem:[#allocation2] sm:$0xf] %v141
    %143 = vst [vmem:[#allocation2 + $0x4] sm:$0xf] %v113
    %v144 = vld [vmem:[#allocation2 + $0x8] sm:$0x1]
    %v145 = vsel %vm65, %v114, %v144
    %146 = vst [vmem:[#allocation2 + $0x8] sm:$0x1] %v145
    %v147 = vld [vmem:[#allocation2 + $0xc] sm:$0xf]
    %v148 = vsel %vm139, %v121, %v147
    %149 = vst [vmem:[#allocation2 + $0xc] sm:$0xf] %v148
    %150 = vst [vmem:[#allocation2 + $0x10] sm:$0xf] %v130
    %v151 = vld [vmem:[#allocation2 + $0x14] sm:$0x1]
    %v152 = vsel %vm65, %v131, %v151
    %153 = vst [vmem:[#allocation2 + $0x14] sm:$0x1] %v152
    %v154 = vld [vmem:[#allocation2] sm:$0xf]
    %v155 = vld [vmem:[#allocation2 + $0x4] sm:$0xf]
    %v156 = vld [vmem:[#allocation2 + $0xc] sm:$0xf]
    %v157 = vld [vmem:[#allocation2 + $0x10] sm:$0xf]
    %v158 = vld [vmem:[#allocation7] sm:$0xf]
    %v159 = vld [vmem:[#allocation7 + $0x4] sm:$0xf]
    %v160 = vld [vmem:[#allocation7 + $0x8] sm:$0xf]
    %v161 = vld [vmem:[#allocation7 + $0xc] sm:$0xf]
    %v162 = vld [vmem:[#allocation7 + $0x10] sm:$0xf]
    %v163 = vld [vmem:[#allocation7 + $0x14] sm:$0xf]
    %v164 = vld [vmem:[#allocation7 + $0x18] sm:$0xf]
    %v165 = vld [vmem:[#allocation7 + $0x1c] sm:$0xf]
    %v166 = vld [vmem:[#allocation7 + $0x20] sm:$0xf]
    %v167 = vld [vmem:[#allocation7 + $0x24] sm:$0xf]
    %v168 = vld [vmem:[#allocation7 + $0x28] sm:$0xf]
    %v169 = vld [vmem:[#allocation7 + $0x2c] sm:$0xf]
    %v170 = vld [vmem:[#allocation7 + $0x30] sm:$0xf]
    %v171 = vld [vmem:[#allocation7 + $0x34] sm:$0xf]
    %v172 = vld [vmem:[#allocation7 + $0x38] sm:$0xf]
    %v173 = vld [vmem:[#allocation7 + $0x3c] sm:$0xf]
    %v174 = vld [vmem:[#allocation2 + $0x8] sm:$0x1]
    %v175 = vld [vmem:[#allocation2 + $0x14] sm:$0x1]
    %vm176 = vsmask.f32 3328
    %vm177 = vsmask.f32 7440
    %vm178 = vmor %vm176, %vm177
    %v180 = vshrl.u32 %v154, 16
    %v182 = vrot.slane %v180, 4
    %v183 = vshll.u32 %v154, 16
    %v185 = vrot.slane %v183, 5
    %v186 = vor.u32 %v182, %v185
    %v187 = vrot.slane %v186, 4
    %v189 = vshll.u32 %v155, 16
    %v191 = vrot.slane %v189, 5
    %v192 = vsel %vm178, %v187, %v191
    %v193 = vshrl.u32 %v155, 16
    %v195 = vrot.slane %v193, 4
    %v196 = vor.u32 %v195, %v191
    %v197 = vrot.slane %v196, 4
    %v199 = vshll.u32 %v174, 16
    %v201 = vrot.slane %v199, 5
    %v202 = vsel %vm178, %v197, %v201
    %v204 = vshrl.u32 %v156, 16
    %v206 = vrot.slane %v204, 4
    %v207 = vshll.u32 %v156, 16
    %v209 = vrot.slane %v207, 5
    %v210 = vor.u32 %v206, %v209
    %v211 = vrot.slane %v210, 4
    %v213 = vshll.u32 %v157, 16
    %v215 = vrot.slane %v213, 5
    %v216 = vsel %vm178, %v211, %v215
    %v217 = vshrl.u32 %v157, 16
    %v219 = vrot.slane %v217, 4
    %v220 = vor.u32 %v219, %v215
    %v221 = vrot.slane %v220, 4
    %v223 = vshll.u32 %v175, 16
    %v225 = vrot.slane %v223, 5
    %v226 = vsel %vm178, %v221, %v225
    %s227 = scalar_lea.vmem [#allocation7], 64
    %v228 = vld [vmem:[%s227] sm:$0xf]
    %v229 = vld [vmem:[%s227 + $0x4] sm:$0xf]
    %v230 = vld [vmem:[%s227 + $0x8] sm:$0xf]
    %v231 = vld [vmem:[%s227 + $0xc] sm:$0xf]
    %v232 = vld [vmem:[%s227 + $0x10] sm:$0xf]
    %v233 = vld [vmem:[%s227 + $0x14] sm:$0xf]
    %v234 = vld [vmem:[%s227 + $0x18] sm:$0xf]
    %v235 = vld [vmem:[%s227 + $0x1c] sm:$0xf]
    %v236 = vld [vmem:[%s227 + $0x20] sm:$0xf]
    %v237 = vld [vmem:[%s227 + $0x24] sm:$0xf]
    %v238 = vld [vmem:[%s227 + $0x28] sm:$0xf]
    %v239 = vld [vmem:[%s227 + $0x2c] sm:$0xf]
    %v240 = vld [vmem:[%s227 + $0x30] sm:$0xf]
    %v241 = vld [vmem:[%s227 + $0x34] sm:$0xf]
    %v242 = vld [vmem:[%s227 + $0x38] sm:$0xf]
    %v243 = vld [vmem:[%s227 + $0x3c] sm:$0xf]
    %v244 = vunpack.c.l.b16 %v192
    %v245 = vunpack.c.l.b16 %v202
    %v246 = vunpack.c.l.b16 %v216
    %v247 = vunpack.c.l.b16 %v226
    %v248 = vpack.c.b16 %v245, %v244
    %v249 = vpack.c.b16 %v247, %v246
    %v268 = vunpack.c.l.b16 %v228
    %v269 = vunpack.c.l.b16 %v229
    %v270 = vunpack.c.l.b16 %v230
    %v271 = vunpack.c.l.b16 %v231
    %v272 = vunpack.c.l.b16 %v232
    %v273 = vunpack.c.l.b16 %v233
    %v274 = vunpack.c.l.b16 %v234
    %v275 = vunpack.c.l.b16 %v235
    %v276 = vunpack.c.l.b16 %v236
    %v277 = vunpack.c.l.b16 %v237
    %v278 = vunpack.c.l.b16 %v238
    %v279 = vunpack.c.l.b16 %v239
    %v280 = vunpack.c.l.b16 %v240
    %v281 = vunpack.c.l.b16 %v241
    %v282 = vunpack.c.l.b16 %v242
    %v283 = vunpack.c.l.b16 %v243
    %v284 = vpack.c.b16 %v269, %v268
    %v285 = vpack.c.b16 %v271, %v270
    %v286 = vpack.c.b16 %v273, %v272
    %v287 = vpack.c.b16 %v275, %v274
    %v288 = vpack.c.b16 %v277, %v276
    %v289 = vpack.c.b16 %v279, %v278
    %v290 = vpack.c.b16 %v281, %v280
    %v291 = vpack.c.b16 %v283, %v282
    %300 = vmatprep.subr.bf16.mxu0 0
    %301 = vmatpush1.bf16.msra.mxu0 %v291
    %302 = vmatprep.subr.bf16.mxu0 0
    %303 = vmatpush1.bf16.msra.mxu0 %v290
    %304 = vmatprep.subr.bf16.mxu0 0
    %305 = vmatpush1.bf16.msra.mxu0 %v289
    %306 = vmatprep.subr.bf16.mxu0 0
    %307 = vmatpush1.bf16.msra.mxu0 %v288
    %308 = vmatprep.subr.bf16.mxu0 0
    %309 = vmatpush1.bf16.msra.mxu0 %v287
    %310 = vmatprep.subr.bf16.mxu0 0
    %311 = vmatpush1.bf16.msra.mxu0 %v286
    %312 = vmatprep.subr.bf16.mxu0 0
    %313 = vmatpush1.bf16.msra.mxu0 %v285
    %314 = vmatprep.subr.bf16.mxu0 0
    %315 = vmatpush1.bf16.msra.mxu0 %v284
    %316 = vmatprep.subr.bf16.mxu0 0
    %317 = vmatpush2.bf16.msra.mxu0 0
    %318 = vmatprep.subr.bf16.mxu0 0
    %319 = vmatpush2.bf16.msra.mxu0 0
    %320 = vmatprep.subr.bf16.mxu0 0
    %321 = vmatpush2.bf16.msra.mxu0 0
    %322 = vmatprep.subr.bf16.mxu0 0
    %323 = vmatpush2.bf16.msra.mxu0 0
    %324 = vmatprep.subr.bf16.mxu0 0
    %325 = vmatpush2.bf16.msra.mxu0 0
    %326 = vmatprep.subr.bf16.mxu0 0
    %327 = vmatpush2.bf16.msra.mxu0 0
    %328 = vmatprep.subr.bf16.mxu0 0
    %329 = vmatpush2.bf16.msra.mxu0 0
    %330 = vmatprep.subr.bf16.mxu0 0
    %331 = vmatpush2.bf16.msra.mxu0 0
    %332 = vmatprep.mubr.bf16.mxu0 0
    %333 = vmatmul.mubr.bf16.gmra.mxu0 %v248
    %v334 = vpop.f32.mrf.mxu0
    %v335 = vadd.f32 0.0, %v334
    %v336 = vpop.f32.mrf.mxu0
    %v337 = vpop.f32.mrf.mxu0
    %v338 = vadd.f32 0.0, %v337
    %v339 = vpop.f32.mrf.mxu0
    %340 = vmatprep.mubr.bf16.mxu0 0
    %341 = vmatmul.mubr.bf16.gmra.mxu0 %v249
    %v342 = vpop.f32.mrf.mxu0
    %v343 = vadd.f32 0.0, %v342
    %v344 = vpop.f32.mrf.mxu0
    %v345 = vpop.f32.mrf.mxu0
    %v346 = vadd.f32 0.0, %v345
    %v347 = vpop.f32.mrf.mxu0
    %348 = vdwg.mxu0
    %v353 = vunpack.c.l.b16 %v154
    %v354 = vunpack.c.l.b16 %v155
    %v355 = vunpack.c.l.b16 %v156
    %v356 = vunpack.c.l.b16 %v157
    %v357 = vpack.c.b16 %v354, %v353
    %v358 = vpack.c.b16 %v356, %v355
    %v377 = vunpack.c.l.b16 %v158
    %v378 = vunpack.c.l.b16 %v159
    %v379 = vunpack.c.l.b16 %v160
    %v380 = vunpack.c.l.b16 %v161
    %v381 = vunpack.c.l.b16 %v162
    %v382 = vunpack.c.l.b16 %v163
    %v383 = vunpack.c.l.b16 %v164
    %v384 = vunpack.c.l.b16 %v165
    %v385 = vunpack.c.l.b16 %v166
    %v386 = vunpack.c.l.b16 %v167
    %v387 = vunpack.c.l.b16 %v168
    %v388 = vunpack.c.l.b16 %v169
    %v389 = vunpack.c.l.b16 %v170
    %v390 = vunpack.c.l.b16 %v171
    %v391 = vunpack.c.l.b16 %v172
    %v392 = vunpack.c.l.b16 %v173
    %v393 = vpack.c.b16 %v378, %v377
    %v394 = vpack.c.b16 %v380, %v379
    %v395 = vpack.c.b16 %v382, %v381
    %v396 = vpack.c.b16 %v384, %v383
    %v397 = vpack.c.b16 %v386, %v385
    %v398 = vpack.c.b16 %v388, %v387
    %v399 = vpack.c.b16 %v390, %v389
    %v400 = vpack.c.b16 %v392, %v391
    %409 = vmatprep.subr.bf16.mxu0 0
    %410 = vmatpush1.bf16.msra.mxu0 %v400
    %411 = vmatprep.subr.bf16.mxu0 0
    %412 = vmatpush1.bf16.msra.mxu0 %v399
    %413 = vmatprep.subr.bf16.mxu0 0
    %414 = vmatpush1.bf16.msra.mxu0 %v398
    %415 = vmatprep.subr.bf16.mxu0 0
    %416 = vmatpush1.bf16.msra.mxu0 %v397
    %417 = vmatprep.subr.bf16.mxu0 0
    %418 = vmatpush1.bf16.msra.mxu0 %v396
    %419 = vmatprep.subr.bf16.mxu0 0
    %420 = vmatpush1.bf16.msra.mxu0 %v395
    %421 = vmatprep.subr.bf16.mxu0 0
    %422 = vmatpush1.bf16.msra.mxu0 %v394
    %423 = vmatprep.subr.bf16.mxu0 0
    %424 = vmatpush1.bf16.msra.mxu0 %v393
    %425 = vmatprep.subr.bf16.mxu0 0
    %426 = vmatpush2.bf16.msra.mxu0 0
    %427 = vmatprep.subr.bf16.mxu0 0
    %428 = vmatpush2.bf16.msra.mxu0 0
    %429 = vmatprep.subr.bf16.mxu0 0
    %430 = vmatpush2.bf16.msra.mxu0 0
    %431 = vmatprep.subr.bf16.mxu0 0
    %432 = vmatpush2.bf16.msra.mxu0 0
    %433 = vmatprep.subr.bf16.mxu0 0
    %434 = vmatpush2.bf16.msra.mxu0 0
    %435 = vmatprep.subr.bf16.mxu0 0
    %436 = vmatpush2.bf16.msra.mxu0 0
    %437 = vmatprep.subr.bf16.mxu0 0
    %438 = vmatpush2.bf16.msra.mxu0 0
    %439 = vmatprep.subr.bf16.mxu0 0
    %440 = vmatpush2.bf16.msra.mxu0 0
    %441 = vmatprep.mubr.bf16.mxu0 0
    %442 = vmatmul.mubr.bf16.gmra.mxu0 %v357
    %v443 = vpop.f32.mrf.mxu0
    %v444 = vadd.f32 %v335, %v443
    %v445 = vpop.f32.mrf.mxu0
    %v446 = vpop.f32.mrf.mxu0
    %v447 = vadd.f32 %v338, %v446
    %v448 = vpop.f32.mrf.mxu0
    %449 = vmatprep.mubr.bf16.mxu0 0
    %450 = vmatmul.mubr.bf16.gmra.mxu0 %v358
    %v451 = vpop.f32.mrf.mxu0
    %v452 = vadd.f32 %v343, %v451
    %v453 = vpop.f32.mrf.mxu0
    %v454 = vpop.f32.mrf.mxu0
    %v455 = vadd.f32 %v346, %v454
    %v456 = vpop.f32.mrf.mxu0
    %457 = vdwg.mxu0
    %v458 = vld [vmem:[#allocation2] sm:$0xe]
    %v459 = vld [vmem:[#allocation2 + $0xc] sm:$0xe]
    %vm464 = vcmask 1042432
    %vm465 = vcmask 1046532
    %vm466 = vmor %vm464, %vm465
    %v467 = vrot.slane %v458, 5
    %v468 = vrot.slane %v467, 4
    %v469 = vrot.slane %v155, 5
    %v470 = vsel %vm466, %v468, %v469
    %v471 = vrot.slane %v469, 4
    %v472 = vrot.slane %v174, 5
    %v473 = vsel %vm466, %v471, %v472
    %v474 = vrot.slane %v459, 5
    %v475 = vrot.slane %v474, 4
    %v476 = vrot.slane %v157, 5
    %v477 = vsel %vm466, %v475, %v476
    %v478 = vrot.slane %v476, 4
    %v479 = vrot.slane %v175, 5
    %v480 = vsel %vm466, %v478, %v479
    %s481 = scalar_lea.vmem [#allocation7], 128
    %v482 = vld [vmem:[%s481] sm:$0xf]
    %v483 = vld [vmem:[%s481 + $0x4] sm:$0xf]
    %v484 = vld [vmem:[%s481 + $0x8] sm:$0xf]
    %v485 = vld [vmem:[%s481 + $0xc] sm:$0xf]
    %v486 = vld [vmem:[%s481 + $0x10] sm:$0xf]
    %v487 = vld [vmem:[%s481 + $0x14] sm:$0xf]
    %v488 = vld [vmem:[%s481 + $0x18] sm:$0xf]
    %v489 = vld [vmem:[%s481 + $0x1c] sm:$0xf]
    %v490 = vld [vmem:[%s481 + $0x20] sm:$0xf]
    %v491 = vld [vmem:[%s481 + $0x24] sm:$0xf]
    %v492 = vld [vmem:[%s481 + $0x28] sm:$0xf]
    %v493 = vld [vmem:[%s481 + $0x2c] sm:$0xf]
    %v494 = vld [vmem:[%s481 + $0x30] sm:$0xf]
    %v495 = vld [vmem:[%s481 + $0x34] sm:$0xf]
    %v496 = vld [vmem:[%s481 + $0x38] sm:$0xf]
    %v497 = vld [vmem:[%s481 + $0x3c] sm:$0xf]
    %v498 = vunpack.c.l.b16 %v470
    %v499 = vunpack.c.l.b16 %v473
    %v500 = vunpack.c.l.b16 %v477
    %v501 = vunpack.c.l.b16 %v480
    %v502 = vpack.c.b16 %v499, %v498
    %v503 = vpack.c.b16 %v501, %v500
    %v522 = vunpack.c.l.b16 %v482
    %v523 = vunpack.c.l.b16 %v483
    %v524 = vunpack.c.l.b16 %v484
    %v525 = vunpack.c.l.b16 %v485
    %v526 = vunpack.c.l.b16 %v486
    %v527 = vunpack.c.l.b16 %v487
    %v528 = vunpack.c.l.b16 %v488
    %v529 = vunpack.c.l.b16 %v489
    %v530 = vunpack.c.l.b16 %v490
    %v531 = vunpack.c.l.b16 %v491
    %v532 = vunpack.c.l.b16 %v492
    %v533 = vunpack.c.l.b16 %v493
    %v534 = vunpack.c.l.b16 %v494
    %v535 = vunpack.c.l.b16 %v495
    %v536 = vunpack.c.l.b16 %v496
    %v537 = vunpack.c.l.b16 %v497
    %v538 = vpack.c.b16 %v523, %v522
    %v539 = vpack.c.b16 %v525, %v524
    %v540 = vpack.c.b16 %v527, %v526
    %v541 = vpack.c.b16 %v529, %v528
    %v542 = vpack.c.b16 %v531, %v530
    %v543 = vpack.c.b16 %v533, %v532
    %v544 = vpack.c.b16 %v535, %v534
    %v545 = vpack.c.b16 %v537, %v536
    %554 = vmatprep.subr.bf16.mxu0 0
    %555 = vmatpush1.bf16.msra.mxu0 %v545
    %556 = vmatprep.subr.bf16.mxu0 0
    %557 = vmatpush1.bf16.msra.mxu0 %v544
    %558 = vmatprep.subr.bf16.mxu0 0
    %559 = vmatpush1.bf16.msra.mxu0 %v543
    %560 = vmatprep.subr.bf16.mxu0 0
    %561 = vmatpush1.bf16.msra.mxu0 %v542
    %562 = vmatprep.subr.bf16.mxu0 0
    %563 = vmatpush1.bf16.msra.mxu0 %v541
    %564 = vmatprep.subr.bf16.mxu0 0
    %565 = vmatpush1.bf16.msra.mxu0 %v540
    %566 = vmatprep.subr.bf16.mxu0 0
    %567 = vmatpush1.bf16.msra.mxu0 %v539
    %568 = vmatprep.subr.bf16.mxu0 0
    %569 = vmatpush1.bf16.msra.mxu0 %v538
    %570 = vmatprep.subr.bf16.mxu0 0
    %571 = vmatpush2.bf16.msra.mxu0 0
    %572 = vmatprep.subr.bf16.mxu0 0
    %573 = vmatpush2.bf16.msra.mxu0 0
    %574 = vmatprep.subr.bf16.mxu0 0
    %575 = vmatpush2.bf16.msra.mxu0 0
    %576 = vmatprep.subr.bf16.mxu0 0
    %577 = vmatpush2.bf16.msra.mxu0 0
    %578 = vmatprep.subr.bf16.mxu0 0
    %579 = vmatpush2.bf16.msra.mxu0 0
    %580 = vmatprep.subr.bf16.mxu0 0
    %581 = vmatpush2.bf16.msra.mxu0 0
    %582 = vmatprep.subr.bf16.mxu0 0
    %583 = vmatpush2.bf16.msra.mxu0 0
    %584 = vmatprep.subr.bf16.mxu0 0
    %585 = vmatpush2.bf16.msra.mxu0 0
    %586 = vmatprep.mubr.bf16.mxu0 0
    %587 = vmatmul.mubr.bf16.gmra.mxu0 %v502
    %v588 = vpop.f32.mrf.mxu0
    %v589 = vadd.f32 0.0, %v588
    %v590 = vpop.f32.mrf.mxu0
    %v591 = vpop.f32.mrf.mxu0
    %v592 = vadd.f32 0.0, %v591
    %v593 = vpop.f32.mrf.mxu0
    %594 = vmatprep.mubr.bf16.mxu0 0
    %595 = vmatmul.mubr.bf16.gmra.mxu0 %v503
    %v596 = vpop.f32.mrf.mxu0
    %v597 = vadd.f32 0.0, %v596
    %v598 = vpop.f32.mrf.mxu0
    %v599 = vpop.f32.mrf.mxu0
    %v600 = vadd.f32 0.0, %v599
    %v601 = vpop.f32.mrf.mxu0
    %602 = vdwg.mxu0
    %v603 = vadd.f32 %v444, %v589
    %v604 = vadd.f32 %v447, %v592
    %v605 = vadd.f32 %v452, %v597
    %v606 = vadd.f32 %v455, %v600
    %v607 = vld [vmem:[%s2] sm:$0x1]
    %v609 = vlaneseq
    %v610 = vshrl.u32 %v609, 7
    %v611 = vsub.s32 0, %v610
    %v612 = vrot.slane %v607, %v611
    %v614 = vadd.f32 %v603, %v612
    %v615 = vadd.f32 %v604, %v612
    %v616 = vadd.f32 %v605, %v612
    %v617 = vadd.f32 %v606, %v612
    %v618 = vmax.f32 %v614, 0.0
    %v619 = vmax.f32 %v615, 0.0
    %v620 = vmax.f32 %v616, 0.0
    %v621 = vmax.f32 %v617, 0.0
    %v622 = vpack.c.bf16 %v619, %v618
    %v623 = vpack.c.bf16 %v621, %v620
    %v626 = vunpack.c.l.b16 %v622
    %v627 = vunpack.c.h.b16 %v622
    %v628 = vunpack.c.l.b16 %v623
    %v629 = vunpack.c.h.b16 %v623
    %v630 = vpack.c.b16 %v626, %v626
    %v631 = vpack.c.b16 %v627, %v627
    %v632 = vpack.c.b16 %v628, %v628
    %v633 = vpack.c.b16 %v629, %v629
    %v635 = vshrl.u32 %v630, 16
    %v637 = vrot.slane %v635, 7
    %v638 = vshll.u32 %v630, 16
    %v640 = vor.u32 %v637, %v638
    %v641 = vrot.slane %v637, 4
    %v643 = vshrl.u32 %v631, 16
    %v645 = vrot.slane %v643, 7
    %v646 = vshll.u32 %v631, 16
    %v648 = vor.u32 %v645, %v646
    %v649 = vsel %vm97, %v641, %v648
    %v650 = vrot.slane %v645, 4
    %v652 = vshrl.u32 %v632, 16
    %v654 = vrot.slane %v652, 7
    %v655 = vshll.u32 %v632, 16
    %v657 = vor.u32 %v654, %v655
    %v658 = vrot.slane %v654, 4
    %v660 = vshrl.u32 %v633, 16
    %v662 = vrot.slane %v660, 7
    %v663 = vshll.u32 %v633, 16
    %v665 = vor.u32 %v662, %v663
    %v666 = vsel %vm97, %v658, %v665
    %v667 = vrot.slane %v662, 4
    %v674 = vld [vmem:[#allocation3] sm:$0xf]
    %v675 = vsel %vm139, %v640, %v674
    %676 = vst [vmem:[#allocation3] sm:$0xf] %v675
    %677 = vst [vmem:[#allocation3 + $0x4] sm:$0xf] %v649
    %v678 = vld [vmem:[#allocation3 + $0x8] sm:$0x1]
    %v679 = vsel %vm65, %v650, %v678
    %680 = vst [vmem:[#allocation3 + $0x8] sm:$0x1] %v679
    %v681 = vld [vmem:[#allocation3 + $0xc] sm:$0xf]
    %v682 = vsel %vm139, %v657, %v681
    %683 = vst [vmem:[#allocation3 + $0xc] sm:$0xf] %v682
    %684 = vst [vmem:[#allocation3 + $0x10] sm:$0xf] %v666
    %v685 = vld [vmem:[#allocation3 + $0x14] sm:$0x1]
    %v686 = vsel %vm65, %v667, %v685
    %687 = vst [vmem:[#allocation3 + $0x14] sm:$0x1] %v686
    %v688 = vld [vmem:[#allocation3] sm:$0xf]
    %v689 = vld [vmem:[#allocation3 + $0x4] sm:$0xf]
    %v690 = vld [vmem:[#allocation3 + $0xc] sm:$0xf]
    %v691 = vld [vmem:[#allocation3 + $0x10] sm:$0xf]
    %v692 = vld [vmem:[#allocation9] sm:$0xf]
    %v693 = vld [vmem:[#allocation9 + $0x4] sm:$0xf]
    %v694 = vld [vmem:[#allocation9 + $0x8] sm:$0xf]
    %v695 = vld [vmem:[#allocation9 + $0xc] sm:$0xf]
    %v696 = vld [vmem:[#allocation9 + $0x10] sm:$0xf]
    %v697 = vld [vmem:[#allocation9 + $0x14] sm:$0xf]
    %v698 = vld [vmem:[#allocation9 + $0x18] sm:$0xf]
    %v699 = vld [vmem:[#allocation9 + $0x1c] sm:$0xf]
    %v700 = vld [vmem:[#allocation9 + $0x20] sm:$0xf]
    %v701 = vld [vmem:[#allocation9 + $0x24] sm:$0xf]
    %v702 = vld [vmem:[#allocation9 + $0x28] sm:$0xf]
    %v703 = vld [vmem:[#allocation9 + $0x2c] sm:$0xf]
    %v704 = vld [vmem:[#allocation9 + $0x30] sm:$0xf]
    %v705 = vld [vmem:[#allocation9 + $0x34] sm:$0xf]
    %v706 = vld [vmem:[#allocation9 + $0x38] sm:$0xf]
    %v707 = vld [vmem:[#allocation9 + $0x3c] sm:$0xf]
    %v708 = vld [vmem:[#allocation3 + $0x8] sm:$0x1]
    %v709 = vld [vmem:[#allocation3 + $0x14] sm:$0x1]
    %v711 = vshrl.u32 %v688, 16
    %v713 = vrot.slane %v711, 4
    %v714 = vshll.u32 %v688, 16
    %v716 = vrot.slane %v714, 5
    %v717 = vor.u32 %v713, %v716
    %v718 = vrot.slane %v717, 4
    %v720 = vshll.u32 %v689, 16
    %v722 = vrot.slane %v720, 5
    %v723 = vsel %vm178, %v718, %v722
    %v724 = vshrl.u32 %v689, 16
    %v726 = vrot.slane %v724, 4
    %v727 = vor.u32 %v726, %v722
    %v728 = vrot.slane %v727, 4
    %v730 = vshll.u32 %v708, 16
    %v732 = vrot.slane %v730, 5
    %v733 = vsel %vm178, %v728, %v732
    %v735 = vshrl.u32 %v690, 16
    %v737 = vrot.slane %v735, 4
    %v738 = vshll.u32 %v690, 16
    %v740 = vrot.slane %v738, 5
    %v741 = vor.u32 %v737, %v740
    %v742 = vrot.slane %v741, 4
    %v744 = vshll.u32 %v691, 16
    %v746 = vrot.slane %v744, 5
    %v747 = vsel %vm178, %v742, %v746
    %v748 = vshrl.u32 %v691, 16
    %v750 = vrot.slane %v748, 4
    %v751 = vor.u32 %v750, %v746
    %v752 = vrot.slane %v751, 4
    %v754 = vshll.u32 %v709, 16
    %v756 = vrot.slane %v754, 5
    %v757 = vsel %vm178, %v752, %v756
    %s758 = scalar_lea.vmem [#allocation9], 64
    %v759 = vld [vmem:[%s758] sm:$0xf]
    %v760 = vld [vmem:[%s758 + $0x4] sm:$0xf]
    %v761 = vld [vmem:[%s758 + $0x8] sm:$0xf]
    %v762 = vld [vmem:[%s758 + $0xc] sm:$0xf]
    %v763 = vld [vmem:[%s758 + $0x10] sm:$0xf]
    %v764 = vld [vmem:[%s758 + $0x14] sm:$0xf]
    %v765 = vld [vmem:[%s758 + $0x18] sm:$0xf]
    %v766 = vld [vmem:[%s758 + $0x1c] sm:$0xf]
    %v767 = vld [vmem:[%s758 + $0x20] sm:$0xf]
    %v768 = vld [vmem:[%s758 + $0x24] sm:$0xf]
    %v769 = vld [vmem:[%s758 + $0x28] sm:$0xf]
    %v770 = vld [vmem:[%s758 + $0x2c] sm:$0xf]
    %v771 = vld [vmem:[%s758 + $0x30] sm:$0xf]
    %v772 = vld [vmem:[%s758 + $0x34] sm:$0xf]
    %v773 = vld [vmem:[%s758 + $0x38] sm:$0xf]
    %v774 = vld [vmem:[%s758 + $0x3c] sm:$0xf]
    %v775 = vunpack.c.l.b16 %v723
    %v776 = vunpack.c.l.b16 %v733
    %v777 = vunpack.c.l.b16 %v747
    %v778 = vunpack.c.l.b16 %v757
    %v779 = vpack.c.b16 %v776, %v775
    %v780 = vpack.c.b16 %v778, %v777
    %v799 = vunpack.c.l.b16 %v759
    %v800 = vunpack.c.l.b16 %v760
    %v801 = vunpack.c.l.b16 %v761
    %v802 = vunpack.c.l.b16 %v762
    %v803 = vunpack.c.l.b16 %v763
    %v804 = vunpack.c.l.b16 %v764
    %v805 = vunpack.c.l.b16 %v765
    %v806 = vunpack.c.l.b16 %v766
    %v807 = vunpack.c.l.b16 %v767
    %v808 = vunpack.c.l.b16 %v768
    %v809 = vunpack.c.l.b16 %v769
    %v810 = vunpack.c.l.b16 %v770
    %v811 = vunpack.c.l.b16 %v771
    %v812 = vunpack.c.l.b16 %v772
    %v813 = vunpack.c.l.b16 %v773
    %v814 = vunpack.c.l.b16 %v774
    %v815 = vpack.c.b16 %v800, %v799
    %v816 = vpack.c.b16 %v802, %v801
    %v817 = vpack.c.b16 %v804, %v803
    %v818 = vpack.c.b16 %v806, %v805
    %v819 = vpack.c.b16 %v808, %v807
    %v820 = vpack.c.b16 %v810, %v809
    %v821 = vpack.c.b16 %v812, %v811
    %v822 = vpack.c.b16 %v814, %v813
    %831 = vmatprep.subr.bf16.mxu0 0
    %832 = vmatpush1.bf16.msra.mxu0 %v822
    %833 = vmatprep.subr.bf16.mxu0 0
    %834 = vmatpush1.bf16.msra.mxu0 %v821
    %835 = vmatprep.subr.bf16.mxu0 0
    %836 = vmatpush1.bf16.msra.mxu0 %v820
    %837 = vmatprep.subr.bf16.mxu0 0
    %838 = vmatpush1.bf16.msra.mxu0 %v819
    %839 = vmatprep.subr.bf16.mxu0 0
    %840 = vmatpush1.bf16.msra.mxu0 %v818
    %841 = vmatprep.subr.bf16.mxu0 0
    %842 = vmatpush1.bf16.msra.mxu0 %v817
    %843 = vmatprep.subr.bf16.mxu0 0
    %844 = vmatpush1.bf16.msra.mxu0 %v816
    %845 = vmatprep.subr.bf16.mxu0 0
    %846 = vmatpush1.bf16.msra.mxu0 %v815
    %847 = vmatprep.subr.bf16.mxu0 0
    %848 = vmatpush2.bf16.msra.mxu0 0
    %849 = vmatprep.subr.bf16.mxu0 0
    %850 = vmatpush2.bf16.msra.mxu0 0
    %851 = vmatprep.subr.bf16.mxu0 0
    %852 = vmatpush2.bf16.msra.mxu0 0
    %853 = vmatprep.subr.bf16.mxu0 0
    %854 = vmatpush2.bf16.msra.mxu0 0
    %855 = vmatprep.subr.bf16.mxu0 0
    %856 = vmatpush2.bf16.msra.mxu0 0
    %857 = vmatprep.subr.bf16.mxu0 0
    %858 = vmatpush2.bf16.msra.mxu0 0
    %859 = vmatprep.subr.bf16.mxu0 0
    %860 = vmatpush2.bf16.msra.mxu0 0
    %861 = vmatprep.subr.bf16.mxu0 0
    %862 = vmatpush2.bf16.msra.mxu0 0
    %863 = vmatprep.mubr.bf16.mxu0 0
    %864 = vmatmul.mubr.bf16.gmra.mxu0 %v779
    %v865 = vpop.f32.mrf.mxu0
    %v866 = vadd.f32 0.0, %v865
    %v867 = vpop.f32.mrf.mxu0
    %v868 = vpop.f32.mrf.mxu0
    %v869 = vadd.f32 0.0, %v868
    %v870 = vpop.f32.mrf.mxu0
    %871 = vmatprep.mubr.bf16.mxu0 0
    %872 = vmatmul.mubr.bf16.gmra.mxu0 %v780
    %v873 = vpop.f32.mrf.mxu0
    %v874 = vadd.f32 0.0, %v873
    %v875 = vpop.f32.mrf.mxu0
    %v876 = vpop.f32.mrf.mxu0
    %v877 = vadd.f32 0.0, %v876
    %v878 = vpop.f32.mrf.mxu0
    %879 = vdwg.mxu0
    %v884 = vunpack.c.l.b16 %v688
    %v885 = vunpack.c.l.b16 %v689
    %v886 = vunpack.c.l.b16 %v690
    %v887 = vunpack.c.l.b16 %v691
    %v888 = vpack.c.b16 %v885, %v884
    %v889 = vpack.c.b16 %v887, %v886
    %v908 = vunpack.c.l.b16 %v692
    %v909 = vunpack.c.l.b16 %v693
    %v910 = vunpack.c.l.b16 %v694
    %v911 = vunpack.c.l.b16 %v695
    %v912 = vunpack.c.l.b16 %v696
    %v913 = vunpack.c.l.b16 %v697
    %v914 = vunpack.c.l.b16 %v698
    %v915 = vunpack.c.l.b16 %v699
    %v916 = vunpack.c.l.b16 %v700
    %v917 = vunpack.c.l.b16 %v701
    %v918 = vunpack.c.l.b16 %v702
    %v919 = vunpack.c.l.b16 %v703
    %v920 = vunpack.c.l.b16 %v704
    %v921 = vunpack.c.l.b16 %v705
    %v922 = vunpack.c.l.b16 %v706
    %v923 = vunpack.c.l.b16 %v707
    %v924 = vpack.c.b16 %v909, %v908
    %v925 = vpack.c.b16 %v911, %v910
    %v926 = vpack.c.b16 %v913, %v912
    %v927 = vpack.c.b16 %v915, %v914
    %v928 = vpack.c.b16 %v917, %v916
    %v929 = vpack.c.b16 %v919, %v918
    %v930 = vpack.c.b16 %v921, %v920
    %v931 = vpack.c.b16 %v923, %v922
    %940 = vmatprep.subr.bf16.mxu0 0
    %941 = vmatpush1.bf16.msra.mxu0 %v931
    %942 = vmatprep.subr.bf16.mxu0 0
    %943 = vmatpush1.bf16.msra.mxu0 %v930
    %944 = vmatprep.subr.bf16.mxu0 0
    %945 = vmatpush1.bf16.msra.mxu0 %v929
    %946 = vmatprep.subr.bf16.mxu0 0
    %947 = vmatpush1.bf16.msra.mxu0 %v928
    %948 = vmatprep.subr.bf16.mxu0 0
    %949 = vmatpush1.bf16.msra.mxu0 %v927
    %950 = vmatprep.subr.bf16.mxu0 0
    %951 = vmatpush1.bf16.msra.mxu0 %v926
    %952 = vmatprep.subr.bf16.mxu0 0
    %953 = vmatpush1.bf16.msra.mxu0 %v925
    %954 = vmatprep.subr.bf16.mxu0 0
    %955 = vmatpush1.bf16.msra.mxu0 %v924
    %956 = vmatprep.subr.bf16.mxu0 0
    %957 = vmatpush2.bf16.msra.mxu0 0
    %958 = vmatprep.subr.bf16.mxu0 0
    %959 = vmatpush2.bf16.msra.mxu0 0
    %960 = vmatprep.subr.bf16.mxu0 0
    %961 = vmatpush2.bf16.msra.mxu0 0
    %962 = vmatprep.subr.bf16.mxu0 0
    %963 = vmatpush2.bf16.msra.mxu0 0
    %964 = vmatprep.subr.bf16.mxu0 0
    %965 = vmatpush2.bf16.msra.mxu0 0
    %966 = vmatprep.subr.bf16.mxu0 0
    %967 = vmatpush2.bf16.msra.mxu0 0
    %968 = vmatprep.subr.bf16.mxu0 0
    %969 = vmatpush2.bf16.msra.mxu0 0
    %970 = vmatprep.subr.bf16.mxu0 0
    %971 = vmatpush2.bf16.msra.mxu0 0
    %972 = vmatprep.mubr.bf16.mxu0 0
    %973 = vmatmul.mubr.bf16.gmra.mxu0 %v888
    %v974 = vpop.f32.mrf.mxu0
    %v975 = vadd.f32 %v866, %v974
    %v976 = vpop.f32.mrf.mxu0
    %v977 = vpop.f32.mrf.mxu0
    %v978 = vadd.f32 %v869, %v977
    %v979 = vpop.f32.mrf.mxu0
    %980 = vmatprep.mubr.bf16.mxu0 0
    %981 = vmatmul.mubr.bf16.gmra.mxu0 %v889
    %v982 = vpop.f32.mrf.mxu0
    %v983 = vadd.f32 %v874, %v982
    %v984 = vpop.f32.mrf.mxu0
    %v985 = vpop.f32.mrf.mxu0
    %v986 = vadd.f32 %v877, %v985
    %v987 = vpop.f32.mrf.mxu0
    %988 = vdwg.mxu0
    %v989 = vld [vmem:[#allocation3] sm:$0xe]
    %v990 = vld [vmem:[#allocation3 + $0xc] sm:$0xe]
    %v995 = vrot.slane %v989, 5
    %v996 = vrot.slane %v995, 4
    %v997 = vrot.slane %v689, 5
    %v998 = vsel %vm466, %v996, %v997
    %v999 = vrot.slane %v997, 4
    %v1000 = vrot.slane %v708, 5
    %v1001 = vsel %vm466, %v999, %v1000
    %v1002 = vrot.slane %v990, 5
    %v1003 = vrot.slane %v1002, 4
    %v1004 = vrot.slane %v691, 5
    %v1005 = vsel %vm466, %v1003, %v1004
    %v1006 = vrot.slane %v1004, 4
    %v1007 = vrot.slane %v709, 5
    %v1008 = vsel %vm466, %v1006, %v1007
    %s1009 = scalar_lea.vmem [#allocation9], 128
    %v1010 = vld [vmem:[%s1009] sm:$0xf]
    %v1011 = vld [vmem:[%s1009 + $0x4] sm:$0xf]
    %v1012 = vld [vmem:[%s1009 + $0x8] sm:$0xf]
    %v1013 = vld [vmem:[%s1009 + $0xc] sm:$0xf]
    %v1014 = vld [vmem:[%s1009 + $0x10] sm:$0xf]
    %v1015 = vld [vmem:[%s1009 + $0x14] sm:$0xf]
    %v1016 = vld [vmem:[%s1009 + $0x18] sm:$0xf]
    %v1017 = vld [vmem:[%s1009 + $0x1c] sm:$0xf]
    %v1018 = vld [vmem:[%s1009 + $0x20] sm:$0xf]
    %v1019 = vld [vmem:[%s1009 + $0x24] sm:$0xf]
    %v1020 = vld [vmem:[%s1009 + $0x28] sm:$0xf]
    %v1021 = vld [vmem:[%s1009 + $0x2c] sm:$0xf]
    %v1022 = vld [vmem:[%s1009 + $0x30] sm:$0xf]
    %v1023 = vld [vmem:[%s1009 + $0x34] sm:$0xf]
    %v1024 = vld [vmem:[%s1009 + $0x38] sm:$0xf]
    %v1025 = vld [vmem:[%s1009 + $0x3c] sm:$0xf]
    %v1026 = vunpack.c.l.b16 %v998
    %v1027 = vunpack.c.l.b16 %v1001
    %v1028 = vunpack.c.l.b16 %v1005
    %v1029 = vunpack.c.l.b16 %v1008
    %v1030 = vpack.c.b16 %v1027, %v1026
    %v1031 = vpack.c.b16 %v1029, %v1028
    %v1050 = vunpack.c.l.b16 %v1010
    %v1051 = vunpack.c.l.b16 %v1011
    %v1052 = vunpack.c.l.b16 %v1012
    %v1053 = vunpack.c.l.b16 %v1013
    %v1054 = vunpack.c.l.b16 %v1014
    %v1055 = vunpack.c.l.b16 %v1015
    %v1056 = vunpack.c.l.b16 %v1016
    %v1057 = vunpack.c.l.b16 %v1017
    %v1058 = vunpack.c.l.b16 %v1018
    %v1059 = vunpack.c.l.b16 %v1019
    %v1060 = vunpack.c.l.b16 %v1020
    %v1061 = vunpack.c.l.b16 %v1021
    %v1062 = vunpack.c.l.b16 %v1022
    %v1063 = vunpack.c.l.b16 %v1023
    %v1064 = vunpack.c.l.b16 %v1024
    %v1065 = vunpack.c.l.b16 %v1025
    %v1066 = vpack.c.b16 %v1051, %v1050
    %v1067 = vpack.c.b16 %v1053, %v1052
    %v1068 = vpack.c.b16 %v1055, %v1054
    %v1069 = vpack.c.b16 %v1057, %v1056
    %v1070 = vpack.c.b16 %v1059, %v1058
    %v1071 = vpack.c.b16 %v1061, %v1060
    %v1072 = vpack.c.b16 %v1063, %v1062
    %v1073 = vpack.c.b16 %v1065, %v1064
    %1082 = vmatprep.subr.bf16.mxu0 0
    %1083 = vmatpush1.bf16.msra.mxu0 %v1073
    %1084 = vmatprep.subr.bf16.mxu0 0
    %1085 = vmatpush1.bf16.msra.mxu0 %v1072
    %1086 = vmatprep.subr.bf16.mxu0 0
    %1087 = vmatpush1.bf16.msra.mxu0 %v1071
    %1088 = vmatprep.subr.bf16.mxu0 0
    %1089 = vmatpush1.bf16.msra.mxu0 %v1070
    %1090 = vmatprep.subr.bf16.mxu0 0
    %1091 = vmatpush1.bf16.msra.mxu0 %v1069
    %1092 = vmatprep.subr.bf16.mxu0 0
    %1093 = vmatpush1.bf16.msra.mxu0 %v1068
    %1094 = vmatprep.subr.bf16.mxu0 0
    %1095 = vmatpush1.bf16.msra.mxu0 %v1067
    %1096 = vmatprep.subr.bf16.mxu0 0
    %1097 = vmatpush1.bf16.msra.mxu0 %v1066
    %1098 = vmatprep.subr.bf16.mxu0 0
    %1099 = vmatpush2.bf16.msra.mxu0 0
    %1100 = vmatprep.subr.bf16.mxu0 0
    %1101 = vmatpush2.bf16.msra.mxu0 0
    %1102 = vmatprep.subr.bf16.mxu0 0
    %1103 = vmatpush2.bf16.msra.mxu0 0
    %1104 = vmatprep.subr.bf16.mxu0 0
    %1105 = vmatpush2.bf16.msra.mxu0 0
    %1106 = vmatprep.subr.bf16.mxu0 0
    %1107 = vmatpush2.bf16.msra.mxu0 0
    %1108 = vmatprep.subr.bf16.mxu0 0
    %1109 = vmatpush2.bf16.msra.mxu0 0
    %1110 = vmatprep.subr.bf16.mxu0 0
    %1111 = vmatpush2.bf16.msra.mxu0 0
    %1112 = vmatprep.subr.bf16.mxu0 0
    %1113 = vmatpush2.bf16.msra.mxu0 0
    %1114 = vmatprep.mubr.bf16.mxu0 0
    %1115 = vmatmul.mubr.bf16.gmra.mxu0 %v1030
    %v1116 = vpop.f32.mrf.mxu0
    %v1117 = vadd.f32 0.0, %v1116
    %v1118 = vpop.f32.mrf.mxu0
    %v1119 = vpop.f32.mrf.mxu0
    %v1120 = vadd.f32 0.0, %v1119
    %v1121 = vpop.f32.mrf.mxu0
    %1122 = vmatprep.mubr.bf16.mxu0 0
    %1123 = vmatmul.mubr.bf16.gmra.mxu0 %v1031
    %v1124 = vpop.f32.mrf.mxu0
    %v1125 = vadd.f32 0.0, %v1124
    %v1126 = vpop.f32.mrf.mxu0
    %v1127 = vpop.f32.mrf.mxu0
    %v1128 = vadd.f32 0.0, %v1127
    %v1129 = vpop.f32.mrf.mxu0
    %1130 = vdwg.mxu0
    %v1131 = vadd.f32 %v975, %v1117
    %v1132 = vadd.f32 %v978, %v1120
    %v1133 = vadd.f32 %v983, %v1125
    %v1134 = vadd.f32 %v986, %v1128
    %v1135 = vld [vmem:[%s4] sm:$0x1]
    %v1137 = vlaneseq
    %v1138 = vshrl.u32 %v1137, 7
    %v1139 = vsub.s32 0, %v1138
    %v1140 = vrot.slane %v1135, %v1139
    %v1142 = vadd.f32 %v1131, %v1140
    %v1143 = vadd.f32 %v1132, %v1140
    %v1144 = vadd.f32 %v1133, %v1140
    %v1145 = vadd.f32 %v1134, %v1140
    %v1146 = vmax.f32 %v1142, 0.0
    %v1147 = vmax.f32 %v1143, 0.0
    %v1148 = vmax.f32 %v1144, 0.0
    %v1149 = vmax.f32 %v1145, 0.0
    %1150 = vst [vmem:[#allocation10] sm:$0xff] %v1146
    %1151 = vst [vmem:[#allocation10 + $0x8] sm:$0xff] %v1147
    %1152 = vst [vmem:[#allocation10 + $0x10] sm:$0xff] %v1148
    %1153 = vst [vmem:[#allocation10 + $0x18] sm:$0xff] %v1149
    // Predicated region
    $region34: #{tpu_custom_call.1} parent=1 // pred_check
      _
    $region35: #{tpu_custom_call.1} parent=1 // pred_check_branch
      %1155 = sbr.rel (0) target = $region37
    $region36: #{tpu_custom_call.1} parent=1 // pred_region
      %s1157 = ssub.s32 512, 512
      %1158 = vsyncadd [#allocation6], %s1157
      %s1159 = sshll.u32 [#allocation10], 4
      %s1160 = int_to_ptr.vmem [resolvable:$true] %s1159
      %1165 = dma.vmem_to_hbm [thread:$0]  %s1160, 512, %s5, [#allocation6], 128, 128, 8
    $region37: #{tpu_custom_call.1} parent=1 // pred_fallthru
      _
    // Predicated region
    $region38: #{tpu_custom_call.1} parent=1 // pred_check
      _
    $region39: #{tpu_custom_call.1} parent=1 // pred_check_branch
      %1167 = sbr.rel (0) target = $region41
    $region40: #{tpu_custom_call.1} parent=1 // pred_region
      %1168 = dma.done [#allocation6], 512
    $region41: #{tpu_custom_call.1} parent=1 // pred_fallthru
      _
    %1169 = vsyncpa [#allocation5], 1
    %1170 = vsyncpa [#allocation8], 1
    %1171 = vsyncpa [#allocation6], 1

</llo_original>
